<compile_context>
chip_gen: v5e
topology: v5e:2x2
jax: 0.10.0
libtpu: 0.0.40
codegen_flags: <defaults>
</compile_context>

<pallas_src>
import functools

import jax
import jax.numpy as jnp
from jax.experimental import pallas as pl
from jax.experimental.pallas import tpu as pltpu


_MIB = 1024 * 1024


# ---------------------------------------------------------------------------
# Small planning helpers
# ---------------------------------------------------------------------------
def _cdiv(a, d):
    return -(-int(a) // int(d))


def _round_down8(n):
    return max(8, (int(n) // 8) * 8)


def _round_up128(n):
    return ((int(n) + 127) // 128) * 128


def _vmem_capacity_bytes():
    """Best-effort physical VMEM query with safe fallbacks."""
    try:
        return int(pltpu.get_tpu_info().vmem_capacity_bytes)
    except Exception:
        pass
    try:
        kind = jax.devices()[0].device_kind.lower()
        if "v7" in kind:
            return 64 * _MIB
    except Exception:
        pass
    return 128 * _MIB


def _pipelined_spec(block_shape, index_map, buffer_count, total_steps):
    """Scores-input BlockSpec; 3-deep pipeline on large-VMEM parts if useful."""
    if buffer_count > 2 and total_steps >= buffer_count:
        try:
            return pl.BlockSpec(block_shape, index_map,
                                pipeline_mode=pl.Buffered(buffer_count))
        except Exception:  # older BlockSpec without pipeline_mode: default 2-deep
            pass
    return pl.BlockSpec(block_shape, index_map)


# ---------------------------------------------------------------------------
# Kernels
# ---------------------------------------------------------------------------
def _ce_ls_single_pass_kernel(scores_ref, labels_ref, partial_ref, *,
                              epsilon, num_classes, batch_size, block_rows):
    # scores_ref : (TB, C)  streamed input dtype, cast in-register
    # labels_ref : (TB, 1)  int32
    # partial_ref: (1, 128) float32 lane-dense per-tile partial sum
    tile = pl.program_id(0)

    x = scores_ref[...].astype(jnp.float32)                       # (TB, C)
    tb, c = x.shape
    labels = labels_ref[...]                                      # (TB, 1)
    cls_idx = jax.lax.broadcasted_iota(jnp.int32, (tb, c), 1)

    # Pass 1: row max.  Pass 2: exp-sum (convert/sub/exp fuse into the reduce).
    x_max = jnp.max(x, axis=1, keepdims=True)
    lse = x_max + jnp.log(jnp.sum(jnp.exp(x - x_max), axis=1, keepdims=True))

    # Pass 3: fused label-smoothing weighted sum (sum_j q_j == 1).
    q = jnp.where(cls_idx == labels,
                  (1.0 - epsilon) + epsilon / num_classes,
                  epsilon / num_classes)
    qx = jnp.sum(q * x, axis=1, keepdims=True)

    # Mask padded rows of the (possibly partial) last batch tile.  Keep the
    # select form: it does not propagate NaN/Inf from garbage padded rows.
    row_ids = tile * block_rows + jax.lax.broadcasted_iota(jnp.int32, (tb, 1), 0)
    row_loss = jnp.where(row_ids < batch_size, lse - qx, 0.0)

    # Lane-dense unmasked store of the tile partial sum.
    partial_ref[...] = jnp.full(partial_ref.shape, jnp.sum(row_loss),
                                dtype=jnp.float32)


def _ce_ls_class_tiled_kernel(scores_ref, labels_ref, partial_ref,
                              m_sc, l_sc, s_sc, *,
                              epsilon, num_classes, batch_size,
                              block_rows, block_cols):
    # Online log-sum-exp over class tiles (flash-style).
    # scratch: m_sc/l_sc/s_sc (TB, 1) f32 -> running max / exp-sum / q.x sum.
    bi = pl.program_id(0)
    ki = pl.program_id(1)
    nk = pl.num_programs(1)

    @pl.when(ki == 0)
    def _():
        m_sc[...] = jnp.full_like(m_sc, -jnp.inf)
        l_sc[...] = jnp.zeros_like(l_sc)
        s_sc[...] = jnp.zeros_like(s_sc)

    x = scores_ref[...].astype(jnp.float32)                       # (TB, TC)
    tb, tc = x.shape
    labels = labels_ref[...]                                      # (TB, 1)

    col_ids = ki * block_cols + jax.lax.broadcasted_iota(jnp.int32, (tb, tc), 1)
    col_valid = col_ids < num_classes                             # mask padded cols

    # Running max / rescaled exp-sum.
    x_m = jnp.where(col_valid, x, -jnp.inf)
    m_prev = m_sc[...]
    m_new = jnp.maximum(m_prev, jnp.max(x_m, axis=1, keepdims=True))
    p_sum = jnp.sum(jnp.where(col_valid, jnp.exp(x - m_new), 0.0),
                    axis=1, keepdims=True)
    l_sc[...] = l_sc[...] * jnp.exp(m_prev - m_new) + p_sum
    m_sc[...] = m_new

    # Running q-weighted sum (needs no max subtraction).
    q = jnp.where(col_ids == labels,
                  (1.0 - epsilon) + epsilon / num_classes,
                  epsilon / num_classes)
    s_sc[...] = s_sc[...] + jnp.sum(jnp.where(col_valid, q * x, 0.0),
                                    axis=1, keepdims=True)

    @pl.when(ki == nk - 1)
    def _():
        row_ids = bi * block_rows + jax.lax.broadcasted_iota(jnp.int32, (tb, 1), 0)
        row_loss = m_sc[...] + jnp.log(l_sc[...]) - s_sc[...]
        row_loss = jnp.where(row_ids < batch_size, row_loss, 0.0)
        partial_ref[...] = jnp.full(partial_ref.shape, jnp.sum(row_loss),
                                    dtype=jnp.float32)


# ---------------------------------------------------------------------------
# Wrapper
# ---------------------------------------------------------------------------
def cross_entropy_label_smooth(scores, labels, *, num_classes, epsilon=0.1,
                               class_block=None, batch_block=None):
    """scores: [B, C] float (any float dtype); labels: [B] int. Returns f32 scalar."""
    assert scores.ndim == 2 and scores.shape[1] == num_classes
    b, c = scores.shape
    labels2d = labels.astype(jnp.int32).reshape(b, 1)
    itemsize = int(scores.dtype.itemsize)

    # ---- generation-aware VMEM budget -------------------------------------
    vmem = _vmem_capacity_bytes()
    small_vmem = vmem <= 64 * _MIB            # v7x-class part (64 MiB / TC)
    target = (24 if small_vmem else 48) * _MIB
    vmem_limit = target + 16 * _MIB           # explicit: beats v5e's 16 MiB default
    buffer_count = 2 if small_vmem else 3     # deeper scores pipeline on 128-MiB parts

    # ---- tile planning (counts pipelined input copies + ~3 live f32 temps) --
    row_bytes = buffer_count * c * itemsize + 3 * c * 4
    tb_single = min(b, 2048, max(1, target // row_bytes))
    use_class_tiling = (class_block is not None) or (tb_single < 64 and c > 128)

    if not use_class_tiling:
        tb = b if tb_single >= b else min(b, _round_down8(tb_single))
        if small_vmem and b >= 16:
            # >=2 batch tiles so both v7x TensorCores get work.
            tb = min(tb, _round_down8(_cdiv(b, 2)))
        if batch_block is not None:
            tb = min(int(batch_block), b)
        nb = _cdiv(b, tb)
        grid = (nb,)
        kernel = functools.partial(
            _ce_ls_single_pass_kernel,
            epsilon=float(epsilon), num_classes=int(num_classes),
            batch_size=int(b), block_rows=int(tb))
        in_specs = [
            _pipelined_spec((tb, c), lambda i: (i, 0), buffer_count, nb),
            pl.BlockSpec((tb, 1), lambda i: (i, 0)),
        ]
        out_specs = pl.BlockSpec((1, 128), lambda i: (0, i))
        scratch_shapes = []
        dims = ("parallel",)
        flops = 5 * b * c
    else:
        tb = b if b <= 256 else 256
        if small_vmem and b >= 16:
            tb = min(tb, _round_down8(_cdiv(b, 2)))
        if batch_block is not None:
            tb = min(int(batch_block), b)
        col_bytes = buffer_count * itemsize + 3 * 4
        tc = (target // max(1, tb * col_bytes)) // 128 * 128
        tc = int(max(128, min(tc, _round_up128(c))))
        if class_block is not None:
            tc = int(class_block)
        nb = _cdiv(b, tb)
        nk = _cdiv(c, tc)
        grid = (nb, nk)
        kernel = functools.partial(
            _ce_ls_class_tiled_kernel,
            epsilon=float(epsilon), num_classes=int(num_classes),
            batch_size=int(b), block_rows=int(tb), block_cols=int(tc))
        in_specs = [
            _pipelined_spec((tb, tc), lambda i, k: (i, k), buffer_count, nb * nk),
            pl.BlockSpec((tb, 1), lambda i, k: (i, 0)),
        ]
        out_specs = pl.BlockSpec((1, 128), lambda i, k: (0, i))
        scratch_shapes = [pltpu.VMEM((tb, 1), jnp.float32),
                          pltpu.VMEM((tb, 1), jnp.float32),
                          pltpu.VMEM((tb, 1), jnp.float32)]
        dims = ("parallel", "arbitrary")
        flops = 7 * b * c

    cost = pl.CostEstimate(
        flops=int(flops),
        transcendentals=int(b * c + b),
        bytes_accessed=int(b * c * itemsize + b * 4 + nb * 128 * 4),
    )

    partials = pl.pallas_call(
        kernel,
        out_shape=jax.ShapeDtypeStruct((1, nb * 128), jnp.float32),
        grid=grid,
        in_specs=in_specs,
        out_specs=out_specs,
        scratch_shapes=scratch_shapes,
        compiler_params=pltpu.CompilerParams(
            dimension_semantics=dims,
            vmem_limit_bytes=int(vmem_limit)),
        cost_estimate=cost,
    )(scores, labels2d)

    # Tiny final reduce and the global 1/B scaling in plain JAX.
    per_tile = partials.reshape(nb, 128)[:, 0]
    return jnp.sum(per_tile) * (1.0 / b)


# ---------------------------------------------------------------------------
# Pure-JAX reference (mirrors the PyTorch module)
# ---------------------------------------------------------------------------
def _reference(scores, labels, num_classes, epsilon=0.1):
    log_probs = jax.nn.log_softmax(scores.astype(jnp.float32), axis=1)
    q = jax.nn.one_hot(labels, num_classes, dtype=jnp.float32)
    q = (1.0 - epsilon) * q + epsilon / num_classes
    return (-q * log_probs).mean(0).sum()


if __name__ == "__main__":
    key = jax.random.PRNGKey(0)
    k1, k2, k3, k4 = jax.random.split(key, 4)

    # 1) Small demo matching the module's forward (single class-pass path).
    B, C = 8, 16
    scores = jax.random.normal(k1, (B, C), dtype=jnp.float32)
    labels = jax.random.randint(k2, (B,), 0, C, dtype=jnp.int32)
    loss = cross_entropy_label_smooth(scores, labels, num_classes=C, epsilon=0.1)
    loss = jax.block_until_ready(loss)
    ref = _reference(scores, labels, C, epsilon=0.1)
    assert jnp.allclose(loss, ref, atol=1e-5, rtol=1e-5), (loss, ref)

    # 2) Exercise the class-tiled online-LSE path (forced small blocks):
    #    bf16 input, partial batch tile (24 rows, 16-row tiles) and partial
    #    class tile (384 classes, 256-col tiles).
    B2, C2 = 24, 384
    scores2 = jax.random.normal(k3, (B2, C2), dtype=jnp.bfloat16)
    labels2 = jax.random.randint(k4, (B2,), 0, C2, dtype=jnp.int32)
    loss2 = cross_entropy_label_smooth(scores2, labels2, num_classes=C2,
                                       epsilon=0.1, class_block=256,
                                       batch_block=16)
    loss2 = jax.block_until_ready(loss2)
    ref2 = _reference(scores2, labels2, C2, epsilon=0.1)
    assert jnp.allclose(loss2, ref2, atol=1e-3, rtol=1e-3), (loss2, ref2)

    print("KERNEL_OK")
</pallas_src>

<mosaic_0001>
module attributes {stable_mosaic.version = 11 : i64} {
  func.func @_ce_ls_single_pass_kernel(%arg0: i32, %arg1: memref<8x16xf32, #tpu.memory_space<vmem>>, %arg2: memref<8x1xi32, #tpu.memory_space<vmem>>, %arg3: memref<1x128xf32, #tpu.memory_space<vmem>>) attributes {dimension_semantics = [#tpu.dimension_semantics<parallel>], iteration_bounds = array<i64: 1>, scalar_prefetch = 0 : i64, scratch_operands = 0 : i64, tpu.core_type = #tpu.core_type<tc>, window_params = [{transform_indices = @transform_0, window_bounds = array<i64: 8, 16>}, {transform_indices = @transform_1, window_bounds = array<i64: 8, 1>}, {transform_indices = @transform_2, window_bounds = array<i64: 1, 128>}]} {
    %c0 = arith.constant 0 : index
    %c0_0 = arith.constant 0 : index
    %0 = vector.load %arg1[%c0, %c0_0] : memref<8x16xf32, #tpu.memory_space<vmem>>, vector<8x16xf32>
    %c0_1 = arith.constant 0 : index
    %c0_2 = arith.constant 0 : index
    %1 = vector.load %arg2[%c0_1, %c0_2] : memref<8x1xi32, #tpu.memory_space<vmem>>, vector<8x1xi32>
    %2 = tpu.iota {dimensions = array<i32: 1>} : vector<8x16xi32>
    %cst = arith.constant dense<0xFF800000> : vector<8xf32>
    %3 = vector.multi_reduction <maximumf>, %0, %cst [1] : vector<8x16xf32> to vector<8xf32>
    %4 = vector.shape_cast %3 : vector<8xf32> to vector<8x1xf32>
    %5 = vector.broadcast %4 : vector<8x1xf32> to vector<8x16xf32>
    %6 = arith.subf %0, %5 : vector<8x16xf32>
    %7 = math.exp %6 : vector<8x16xf32>
    %cst_3 = arith.constant dense<0.000000e+00> : vector<8xf32>
    %8 = vector.multi_reduction <add>, %7, %cst_3 [1] : vector<8x16xf32> to vector<8xf32>
    %9 = vector.shape_cast %8 : vector<8xf32> to vector<8x1xf32>
    %10 = math.log %9 : vector<8x1xf32>
    %11 = arith.addf %4, %10 : vector<8x1xf32>
    %12 = vector.broadcast %1 : vector<8x1xi32> to vector<8x16xi32>
    %13 = arith.cmpi eq, %2, %12 : vector<8x16xi32>
    %cst_4 = arith.constant 9.062500e-01 : f32
    %cst_5 = arith.constant 6.250000e-03 : f32
    %14 = vector.broadcast %cst_4 : f32 to vector<8x16xf32>
    %15 = vector.broadcast %cst_5 : f32 to vector<8x16xf32>
    %16 = arith.select %13, %14, %15 : vector<8x16xi1>, vector<8x16xf32>
    %17 = arith.mulf %16, %0 : vector<8x16xf32>
    %cst_6 = arith.constant dense<0.000000e+00> : vector<8xf32>
    %18 = vector.multi_reduction <add>, %17, %cst_6 [1] : vector<8x16xf32> to vector<8xf32>
    %19 = vector.shape_cast %18 : vector<8xf32> to vector<8x1xf32>
    %c8_i32 = arith.constant 8 : i32
    %20 = arith.muli %arg0, %c8_i32 : i32
    %21 = tpu.iota {dimensions = array<i32: 0>} : vector<8x1xi32>
    %22 = vector.broadcast %20 : i32 to vector<8x1xi32>
    %23 = arith.addi %22, %21 : vector<8x1xi32>
    %c8_i32_7 = arith.constant 8 : i32
    %24 = vector.broadcast %c8_i32_7 : i32 to vector<8x1xi32>
    %25 = arith.cmpi slt, %23, %24 : vector<8x1xi32>
    %26 = arith.subf %11, %19 : vector<8x1xf32>
    %cst_8 = arith.constant 0.000000e+00 : f32
    %27 = vector.broadcast %cst_8 : f32 to vector<8x1xf32>
    %28 = arith.select %25, %26, %27 : vector<8x1xi1>, vector<8x1xf32>
    %29 = vector.shape_cast %28 : vector<8x1xf32> to vector<1x8x1xf32>
    %cst_9 = arith.constant dense<0.000000e+00> : vector<1xf32>
    %30 = vector.multi_reduction <add>, %29, %cst_9 [1, 2] : vector<1x8x1xf32> to vector<1xf32>
    %31 = vector.shape_cast %30 : vector<1xf32> to vector<1x1x1xf32>
    %32 = vector.extract %31[0, 0, 0] : f32 from vector<1x1x1xf32>
    %33 = vector.broadcast %32 : f32 to vector<1x128xf32>
    %c0_10 = arith.constant 0 : index
    %c0_11 = arith.constant 0 : index
    %34 = vector.load %arg3[%c0_10, %c0_11] : memref<1x128xf32, #tpu.memory_space<vmem>>, vector<1x128xf32>
    tpu.vector_store %arg3[%c0_10, %c0_11], %33 {strides = array<i32>} : memref<1x128xf32, #tpu.memory_space<vmem>>, vector<1x128xf32>,
    return
  }
  func.func @transform_0(%arg0: i32) -> (i32, i32) {
    %c0_i32 = arith.constant 0 : i32
    %c0_i32_0 = arith.constant 0 : i32
    return %arg0, %c0_i32 : i32, i32
  }
  func.func @transform_1(%arg0: i32) -> (i32, i32) {
    %c0_i32 = arith.constant 0 : i32
    %c0_i32_0 = arith.constant 0 : i32
    return %arg0, %c0_i32 : i32, i32
  }
  func.func @transform_2(%arg0: i32) -> (i32, i32) {
    %c0_i32 = arith.constant 0 : i32
    %c0_i32_0 = arith.constant 0 : i32
    return %c0_i32, %arg0 : i32, i32
  }
}

</mosaic_0001>

<llo_original>
// kernel: tpu_custom_call.1
$region0: #{tpu_custom_call.1}
  #allocation0 [shape = 'u32[]', space=smem, size = 0x4, offset = 0x4, fixed_abs, tag = 'smem constant byte address 0x4 - core index']
  #allocation1 [shape = 'u32[72,128]{1,0:T(1,128)}', space=vmem, size = 0x9000, scoped, tag = 'internal scratch']
  %s0 = inlined_call_operand.vmem [shape: f32[8,16], index: 0, kind: input, shape index: {}]
  %s1 = inlined_call_operand.vmem [shape: s32[8,1], index: 1, kind: input, shape index: {}]
  %s2 = inlined_call_operand.hbm [shape: f32[1,128], index: 2, kind: output, shape index: {}]
  %s3 = sld [smem:[#allocation0]]
  $region18: #{tpu_custom_call.1} parent=0
    _
  %s5 = ssub.s32 1, %s3
  %s6 = scalar_select 0, %s5, %s3
  $region1: #{tpu_custom_call.1} parent=0
    #allocation2 [shape = 'u8[512]{0}', space=vmem, size = 0x400, scoped, tag = 'output window, operand 0, single buffered']
    #allocation3 [shape = 's32[1]{0}', space=sflag, size = 0x4, scoped, tag = 'scoped memory for tpu_custom_call.1']
    %7 = vsyncpa [#allocation3], 0
    // Predicated region
    $region2: #{tpu_custom_call.1} parent=1 // pred_check
      _
    $region3: #{tpu_custom_call.1} parent=1 // pred_check_branch
      %9 = sbr.rel (0) target = $region5
    $region4: #{tpu_custom_call.1} parent=1 // pred_region
      _
    $region5: #{tpu_custom_call.1} parent=1 // pred_fallthru
      _
    // Predicated region
    $region6: #{tpu_custom_call.1} parent=1 // pred_check
      _
    $region7: #{tpu_custom_call.1} parent=1 // pred_check_branch
      %11 = sbr.rel (0) target = $region9
    $region8: #{tpu_custom_call.1} parent=1 // pred_region
      _
    $region9: #{tpu_custom_call.1} parent=1 // pred_fallthru
      _
    %v12 = vld [vmem:[%s0] sm:$0xff]
    %v13 = vld [vmem:[%s1] sm:$0xff]
    %v14 = vlaneseq
    %v15 = vand.u32 %v14, 127
    %vm16 = vcmask 130048
    %v17 = vsel %vm16, %v12, -inf
    %18 = vmax.xlane.f32.xlu0 %v17
    %v19 = vpop.xlane.xlu0 %18
    %v20 = vsub.f32 %v12, %v19
    %v21 = vmul.f32 %v20, 1.442695
    %v22 = vpow.pop %v21
    %v23 = vsel %vm16, %v22, 0.0
    %24 = vadd.xlane.f32.xlu0 %v23
    %v25 = vpop.xlane.xlu0 %24
    %v26 = vlog2.pop %v25
    %v27 = vmul.f32 %v26, 0.6931472
    %v28 = vadd.f32 %v19, %v27
    %29 = vset.pattern.permute.xlu0 0
    %30 = vperm.xlu0 %29, %v13
    %v31 = vpop.permute.xlu0 %30
    %vm32 = vcmp.eq.s32.totalorder %v15, %v31
    %v33 = vsel %vm32, 0.90625, 0.00625
    %v34 = vmul.f32 %v33, %v12
    %v35 = vsel %vm16, %v34, 0.0
    %36 = vadd.xlane.f32.xlu0 %v35
    %v37 = vpop.xlane.xlu0 %36
    %s38 = smul.u32 0, 8
    %v39 = vlaneseq
    %v40 = vshrl.u32 %v39, 7
    %v41 = vstv %s38
    %v42 = vadd.s32 %v41, %v40
    %vm43 = vcmp.lt.s32.totalorder %v42, 8
    %v44 = vsub.f32 %v28, %v37
    %v45 = vsel %vm43, %v44, 0.0
    %vm46 = vcmask 7168
    %v47 = vsel %vm46, %v45, 0.0
    %48 = vadd.xlane.f32.xlu0 %v47
    %v49 = vpop.xlane.xlu0 %48
    %v50 = vrot.slane %v49, 4
    %v51 = vadd.f32 %v49, %v50
    %v52 = vrot.slane %v51, 2
    %v53 = vadd.f32 %v51, %v52
    %v54 = vrot.slane %v53, 1
    %v55 = vadd.f32 %v53, %v54
    %s56 = vtos %v55
    %v57 = vstv %s56
    %58 = vst [vmem:[#allocation2] sm:$0x1] %v57
    // Predicated region
    $region10: #{tpu_custom_call.1} parent=1 // pred_check
      _
    $region11: #{tpu_custom_call.1} parent=1 // pred_check_branch
      %60 = sbr.rel (0) target = $region13
    $region12: #{tpu_custom_call.1} parent=1 // pred_region
      %62 = vsyncadd [#allocation3], 0
      %s64 = sshll.u32 [#allocation2], 4
      %s65 = int_to_ptr.vmem [resolvable:$true] %s64
      %s66 = sshll.u32 %s2, 4
      %s67 = int_to_ptr.hbm [resolvable:$true] %s66
      %69 = dma.vmem_to_hbm [thread:$0]  %s65, 16, %s67, [#allocation3]
    $region13: #{tpu_custom_call.1} parent=1 // pred_fallthru
      _
    // Predicated region
    $region14: #{tpu_custom_call.1} parent=1 // pred_check
      _
    $region15: #{tpu_custom_call.1} parent=1 // pred_check_branch
      %71 = sbr.rel (0) target = $region17
    $region16: #{tpu_custom_call.1} parent=1 // pred_region
      %73 = dma.done [#allocation3], 16
    $region17: #{tpu_custom_call.1} parent=1 // pred_fallthru
      _
    %74 = vsyncpa [#allocation3], 1

</llo_original>
